<compile_context>
chip_gen: v7x
topology: tpu7x:2x2x1
jax: 0.10.0
libtpu: 0.0.40
codegen_flags: <defaults>
</compile_context>

<pallas_src>
import jax
import jax.numpy as jnp
from jax.experimental import pallas as pl
from jax.experimental.pallas import tpu as pltpu


# ---------------------------------------------------------------------------
# Kernels
# ---------------------------------------------------------------------------
def _fused_mlp_kernel(x_ref, w1_ref, b1_ref, w2_ref, b2_ref, o_ref):
    """Linear -> ReLU -> Linear on one (bm, feat_dim) row tile, weights resident."""
    h = jnp.dot(x_ref[...], w1_ref[...], preferred_element_type=jnp.float32)
    h = jnp.maximum(h + b1_ref[...].astype(jnp.float32), 0.0)
    y = jnp.dot(h.astype(w2_ref.dtype), w2_ref[...],
                preferred_element_type=jnp.float32)
    o_ref[...] = (y + b2_ref[...].astype(jnp.float32)).astype(o_ref.dtype)


def _ktiled_mlp_kernel(x_ref, w1_ref, b1_ref, w2_ref, b2_ref, o_ref, h_acc):
    """K-tiled first matmul: accumulate hidden in f32 scratch, finalize on last K."""
    k = pl.program_id(1)

    @pl.when(k == 0)
    def _():
        h_acc[...] = jnp.zeros_like(h_acc)

    h_acc[...] += jnp.dot(x_ref[...], w1_ref[...],
                          preferred_element_type=jnp.float32)

    @pl.when(k == pl.num_programs(1) - 1)
    def _():
        h = jnp.maximum(h_acc[...] + b1_ref[...].astype(jnp.float32), 0.0)
        y = jnp.dot(h.astype(w2_ref.dtype), w2_ref[...],
                    preferred_element_type=jnp.float32)
        o_ref[...] = (y + b2_ref[...].astype(jnp.float32)).astype(o_ref.dtype)


# ---------------------------------------------------------------------------
# Tiling helpers
# ---------------------------------------------------------------------------
def _vmem_capacity_bytes() -> int:
    """Physical VMEM per TensorCore; conservative (v7x) fallback if unknown."""
    try:
        return int(pltpu.get_tpu_info().vmem_capacity_bytes)
    except Exception:
        return 64 * 1024 * 1024


def _round_rows_mxu(bm: int) -> int:
    """Round a partial row-tile down to an MXU/sublane-friendly multiple."""
    if bm >= 512:
        return (bm // 256) * 256          # full 256-wide MXU passes (v6e/v7x)
    if bm >= 128:
        return (bm // 128) * 128          # v5e MXU granularity
    return max((bm // 8) * 8, 8)          # sublane multiple


def _choose_block_rows(batch: int, per_row_bytes: int, row_budget_bytes: int,
                       target_rows: int) -> int:
    """Largest row tile that fits the budget, with >=2 grid steps for v7x."""
    max_rows = max(row_budget_bytes // max(per_row_bytes, 1), 8)
    bm = min(target_rows, batch, max_rows)
    # Keep at least 2 grid steps along the batch axis so the two v7x
    # TensorCores both get work (this axis is marked "parallel").
    if batch > 8:
        half = -(-batch // 2)              # ceil(batch / 2)
        half = ((half + 7) // 8) * 8       # round up to a sublane multiple
        bm = min(bm, half)
    if bm >= batch:
        return batch                       # full-extent block: no alignment rule
    return _round_rows_mxu(bm)


def _choose_tk(feat_dim: int, hidden: int, itemsize: int,
               w1_tile_budget: int) -> int:
    """Largest multiple-of-128 divisor of feat_dim whose double-buffered
    (tk, hidden) w1 tile fits in w1_tile_budget."""
    best = 128
    tk = 128
    while tk <= feat_dim:
        if feat_dim % tk == 0 and 2 * tk * hidden * itemsize <= w1_tile_budget:
            best = tk
        tk += 128
    return best


def _const_spec(shape, single_buffer: bool) -> pl.BlockSpec:
    """BlockSpec for a grid-invariant operand (index map is constant zero)."""
    index_map = lambda *_: (0,) * len(shape)
    if single_buffer:
        return pl.BlockSpec(shape, index_map, pipeline_mode=pl.Buffered(1))
    return pl.BlockSpec(shape, index_map)


# ---------------------------------------------------------------------------
# Forward wrapper
# ---------------------------------------------------------------------------
def regression_adapter_forward(x, w1, b1, w2, b2, *,
                               block_rows: int = 2048,
                               block_k: int | None = None):
    """Pallas implementation of RegressionAdapter.forward.

    x:  (batch, feat_dim)
    w1: (feat_dim, hidden)   b1: (1, hidden)     with hidden = feat_dim // 2
    w2: (hidden, output_dim) b2: (1, output_dim)
    returns (batch, output_dim), same dtype as x.
    """
    assert x.ndim == 2, "expected (batch, feat_dim) input"
    batch, feat_dim = x.shape
    hidden = w1.shape[1]
    out_dim = w2.shape[1]
    assert w1.shape == (feat_dim, hidden)
    assert w2.shape == (hidden, out_dim)
    assert b1.shape == (1, hidden) and b2.shape == (1, out_dim)

    itemsize = jnp.dtype(x.dtype).itemsize

    # Generation-aware VMEM sizing: ~3/4 of physical capacity as the scoped
    # limit (96 MiB on v5e/v6e, 48 MiB on v7x), minus headroom for the tiles.
    capacity = _vmem_capacity_bytes()
    vmem_limit = (capacity * 3) // 4
    tile_budget = max(vmem_limit - 6 * 1024 * 1024, 8 * 1024 * 1024)

    w_full_bytes = itemsize * (feat_dim * hidden + hidden
                               + hidden * out_dim + out_dim)
    per_row_fused = (2 * itemsize * feat_dim            # x tile, double buffered
                     + 2 * itemsize * out_dim           # out tile, double buffered
                     + 4 * (hidden + out_dim))          # f32 intermediates

    # Path selection: fully-resident weights if they fit (even if the compiler
    # ends up double-buffering them), otherwise K-tile the first matmul.
    fused_fits = 2 * w_full_bytes + 8 * per_row_fused <= tile_budget
    can_k_tile = (feat_dim % 128 == 0) and (feat_dim > 128)
    if block_k is not None and can_k_tile:
        assert block_k % 128 == 0 and feat_dim % block_k == 0
        use_k, tk = True, block_k
    elif (not fused_fits) and can_k_tile:
        use_k = True
        tk = _choose_tk(feat_dim, hidden, itemsize, tile_budget // 3)
    else:
        use_k, tk = False, feat_dim
        # TODO(synk): if feat_dim is huge and not a 128-multiple the resident
        # weights may still exceed VMEM; fall back to plain XLA in that case.

    if use_k:
        k_tiles = feat_dim // tk
        w_resident = itemsize * (2 * tk * hidden      # w1 tiles (double buffered)
                                 + hidden + hidden * out_dim + out_dim)
        per_row = (2 * itemsize * tk + 2 * itemsize * out_dim
                   + 4 * hidden                        # f32 h_acc scratch
                   + 4 * (hidden + out_dim))
    else:
        k_tiles = 1
        w_resident = 2 * w_full_bytes                  # conservative (fallback-safe)
        per_row = per_row_fused

    bm = _choose_block_rows(batch, per_row, tile_budget - w_resident, block_rows)

    def run(single_buffer_weights: bool):
        if use_k:
            in_specs = [
                pl.BlockSpec((bm, tk), lambda i, k: (i, k)),       # x (M, K) tile
                pl.BlockSpec((tk, hidden), lambda i, k: (k, 0)),   # w1 K tile
                _const_spec((1, hidden), single_buffer_weights),   # b1
                _const_spec((hidden, out_dim), single_buffer_weights),  # w2
                _const_spec((1, out_dim), single_buffer_weights),  # b2
            ]
            out_spec = pl.BlockSpec((bm, out_dim), lambda i, k: (i, 0))
            grid = (pl.cdiv(batch, bm), k_tiles)
            scratch = [pltpu.VMEM((bm, hidden), jnp.float32)]
            kernel = _ktiled_mlp_kernel
            semantics = ("parallel", "arbitrary")
        else:
            in_specs = [
                pl.BlockSpec((bm, feat_dim), lambda i: (i, 0)),          # x row tile
                _const_spec((feat_dim, hidden), single_buffer_weights),  # w1
                _const_spec((1, hidden), single_buffer_weights),         # b1
                _const_spec((hidden, out_dim), single_buffer_weights),   # w2
                _const_spec((1, out_dim), single_buffer_weights),        # b2
            ]
            out_spec = pl.BlockSpec((bm, out_dim), lambda i: (i, 0))
            grid = (pl.cdiv(batch, bm),)
            scratch = []
            kernel = _fused_mlp_kernel
            semantics = ("parallel",)

        return pl.pallas_call(
            kernel,
            out_shape=jax.ShapeDtypeStruct((batch, out_dim), x.dtype),
            grid_spec=pltpu.PrefetchScalarGridSpec(
                num_scalar_prefetch=0,
                grid=grid,
                in_specs=in_specs,
                out_specs=out_spec,
                scratch_shapes=scratch,
            ),
            compiler_params=pltpu.CompilerParams(
                dimension_semantics=semantics,
                vmem_limit_bytes=int(vmem_limit),
            ),
        )(x, w1, b1, w2, b2)

    try:
        # Grid-invariant weights single-buffered (halves their VMEM footprint).
        return run(True)
    except Exception:
        # Graceful fallback for environments rejecting pipeline_mode/Buffered(1).
        return run(False)


# ---------------------------------------------------------------------------
# Module wrapper (PyTorch-equivalent parameterization)
# ---------------------------------------------------------------------------
class RegressionAdapter:
    """JAX/Pallas counterpart of the PyTorch RegressionAdapter.

    head = Linear(feat_dim, feat_dim // 2) -> ReLU -> Linear(feat_dim // 2, output_dim)
    """

    def __init__(self, feat_dim: int, output_dim: int, *, key, dtype=jnp.float32):
        self.feat_dim = feat_dim
        self.hidden = feat_dim // 2
        self.output_dim = output_dim

        k1, k2, k3, k4 = jax.random.split(key, 4)
        # PyTorch nn.Linear default init: U(-1/sqrt(fan_in), 1/sqrt(fan_in)).
        lim1 = 1.0 / (feat_dim ** 0.5)
        lim2 = 1.0 / (self.hidden ** 0.5)
        self.w1 = jax.random.uniform(k1, (feat_dim, self.hidden), dtype,
                                     minval=-lim1, maxval=lim1)
        self.b1 = jax.random.uniform(k2, (1, self.hidden), dtype,
                                     minval=-lim1, maxval=lim1)
        self.w2 = jax.random.uniform(k3, (self.hidden, output_dim), dtype,
                                     minval=-lim2, maxval=lim2)
        self.b2 = jax.random.uniform(k4, (1, output_dim), dtype,
                                     minval=-lim2, maxval=lim2)

    def __call__(self, x: jax.Array) -> jax.Array:
        return regression_adapter_forward(x, self.w1, self.b1, self.w2, self.b2)


def _reference_forward(x, w1, b1, w2, b2):
    h = jnp.maximum(jnp.dot(x, w1) + b1, 0.0)
    return jnp.dot(h, w2) + b2


if __name__ == "__main__":
    key = jax.random.PRNGKey(0)
    k_p1, k_p2, k_x1, k_x2 = jax.random.split(key, 4)

    # --- 1) fused path: feat_dim=128 (hidden=64), output_dim=8, batch=8 ------
    adapter = RegressionAdapter(128, 8, key=k_p1)
    x = jax.random.normal(k_x1, (8, 128), dtype=jnp.float32)
    y = jax.block_until_ready(adapter(x))
    y_ref = _reference_forward(x, adapter.w1, adapter.b1, adapter.w2, adapter.b2)
    assert y.shape == (8, 8) and y.dtype == x.dtype
    assert jnp.allclose(y, y_ref, atol=1e-5, rtol=1e-5), "fused path mismatch"

    # --- 2) K-tiled reduction path (forced): feat_dim=256, tk=128, batch=32 ---
    adapter2 = RegressionAdapter(256, 16, key=k_p2)
    x2 = jax.random.normal(k_x2, (32, 256), dtype=jnp.float32)
    y2 = jax.block_until_ready(
        regression_adapter_forward(x2, adapter2.w1, adapter2.b1,
                                   adapter2.w2, adapter2.b2, block_k=128))
    y2_ref = _reference_forward(x2, adapter2.w1, adapter2.b1,
                                adapter2.w2, adapter2.b2)
    assert y2.shape == (32, 16) and y2.dtype == x2.dtype
    assert jnp.allclose(y2, y2_ref, atol=1e-4, rtol=1e-4), "K-tiled path mismatch"

    print("KERNEL_OK")
</pallas_src>

<mosaic_0001>
module attributes {stable_mosaic.version = 11 : i64} {
  func.func @_fused_mlp_kernel(%arg0: i32, %arg1: memref<8x128xf32, #tpu.memory_space<vmem>>, %arg2: memref<128x64xf32, #tpu.memory_space<vmem>>, %arg3: memref<1x64xf32, #tpu.memory_space<vmem>>, %arg4: memref<64x8xf32, #tpu.memory_space<vmem>>, %arg5: memref<1x8xf32, #tpu.memory_space<vmem>>, %arg6: memref<8x8xf32, #tpu.memory_space<vmem>>) attributes {dimension_semantics = [#tpu.dimension_semantics<parallel>], iteration_bounds = array<i64: 1>, scalar_prefetch = 0 : i64, scratch_operands = 0 : i64, tpu.core_type = #tpu.core_type<tc>, window_params = [{transform_indices = @transform_0, window_bounds = array<i64: 8, 128>}, {pipeline_mode = #tpu.pipeline_mode<synchronous>, transform_indices = @transform_1, window_bounds = array<i64: 128, 64>}, {pipeline_mode = #tpu.pipeline_mode<synchronous>, transform_indices = @transform_2, window_bounds = array<i64: 1, 64>}, {pipeline_mode = #tpu.pipeline_mode<synchronous>, transform_indices = @transform_3, window_bounds = array<i64: 64, 8>}, {pipeline_mode = #tpu.pipeline_mode<synchronous>, transform_indices = @transform_4, window_bounds = array<i64: 1, 8>}, {transform_indices = @transform_5, window_bounds = array<i64: 8, 8>}]} {
    %c0 = arith.constant 0 : index
    %c0_0 = arith.constant 0 : index
    %0 = vector.load %arg1[%c0, %c0_0] : memref<8x128xf32, #tpu.memory_space<vmem>>, vector<8x128xf32>
    %c0_1 = arith.constant 0 : index
    %c0_2 = arith.constant 0 : index
    %1 = vector.load %arg2[%c0_1, %c0_2] : memref<128x64xf32, #tpu.memory_space<vmem>>, vector<128x64xf32>
    %cst = arith.constant dense<0.000000e+00> : vector<8x64xf32>
    %2 = tpu.matmul %0, %1, %cst {dimension_numbers = #tpu.dot_dimension_numbers<[1], [0], [0], [1], [0, 0, 1, 1], [], []>} : vector<8x128xf32>, vector<128x64xf32>, vector<8x64xf32> -> vector<8x64xf32>
    %c0_3 = arith.constant 0 : index
    %c0_4 = arith.constant 0 : index
    %3 = vector.load %arg3[%c0_3, %c0_4] : memref<1x64xf32, #tpu.memory_space<vmem>>, vector<1x64xf32>
    %4 = vector.broadcast %3 : vector<1x64xf32> to vector<8x64xf32>
    %5 = arith.addf %2, %4 : vector<8x64xf32>
    %cst_5 = arith.constant 0.000000e+00 : f32
    %6 = vector.broadcast %cst_5 : f32 to vector<8x64xf32>
    %7 = arith.maximumf %5, %6 : vector<8x64xf32>
    %c0_6 = arith.constant 0 : index
    %c0_7 = arith.constant 0 : index
    %8 = vector.load %arg4[%c0_6, %c0_7] : memref<64x8xf32, #tpu.memory_space<vmem>>, vector<64x8xf32>
    %cst_8 = arith.constant dense<0.000000e+00> : vector<8x8xf32>
    %9 = tpu.matmul %7, %8, %cst_8 {dimension_numbers = #tpu.dot_dimension_numbers<[1], [0], [0], [1], [0, 0, 1, 1], [], []>} : vector<8x64xf32>, vector<64x8xf32>, vector<8x8xf32> -> vector<8x8xf32>
    %c0_9 = arith.constant 0 : index
    %c0_10 = arith.constant 0 : index
    %10 = vector.load %arg5[%c0_9, %c0_10] : memref<1x8xf32, #tpu.memory_space<vmem>>, vector<1x8xf32>
    %11 = vector.broadcast %10 : vector<1x8xf32> to vector<8x8xf32>
    %12 = arith.addf %9, %11 : vector<8x8xf32>
    %c0_11 = arith.constant 0 : index
    %c0_12 = arith.constant 0 : index
    %13 = vector.load %arg6[%c0_11, %c0_12] : memref<8x8xf32, #tpu.memory_space<vmem>>, vector<8x8xf32>
    tpu.vector_store %arg6[%c0_11, %c0_12], %12 {strides = array<i32>} : memref<8x8xf32, #tpu.memory_space<vmem>>, vector<8x8xf32>,
    return
  }
  func.func @transform_0(%arg0: i32) -> (i32, i32) {
    %c0_i32 = arith.constant 0 : i32
    %c0_i32_0 = arith.constant 0 : i32
    return %arg0, %c0_i32 : i32, i32
  }
  func.func @transform_1(%arg0: i32) -> (i32, i32) {
    %c0_i32 = arith.constant 0 : i32
    %c0_i32_0 = arith.constant 0 : i32
    %c0_i32_1 = arith.constant 0 : i32
    return %c0_i32, %c0_i32_0 : i32, i32
  }
  func.func @transform_2(%arg0: i32) -> (i32, i32) {
    %c0_i32 = arith.constant 0 : i32
    %c0_i32_0 = arith.constant 0 : i32
    %c0_i32_1 = arith.constant 0 : i32
    return %c0_i32, %c0_i32_0 : i32, i32
  }
  func.func @transform_3(%arg0: i32) -> (i32, i32) {
    %c0_i32 = arith.constant 0 : i32
    %c0_i32_0 = arith.constant 0 : i32
    %c0_i32_1 = arith.constant 0 : i32
    return %c0_i32, %c0_i32_0 : i32, i32
  }
  func.func @transform_4(%arg0: i32) -> (i32, i32) {
    %c0_i32 = arith.constant 0 : i32
    %c0_i32_0 = arith.constant 0 : i32
    %c0_i32_1 = arith.constant 0 : i32
    return %c0_i32, %c0_i32_0 : i32, i32
  }
  func.func @transform_5(%arg0: i32) -> (i32, i32) {
    %c0_i32 = arith.constant 0 : i32
    %c0_i32_0 = arith.constant 0 : i32
    return %arg0, %c0_i32 : i32, i32
  }
}

module attributes {stable_mosaic.version = 11 : i64} {
  func.func @_fused_mlp_kernel(%arg0: i32, %arg1: memref<8x128xf32, #tpu.memory_space<vmem>>, %arg2: memref<128x64xf32, #tpu.memory_space<vmem>>, %arg3: memref<1x64xf32, #tpu.memory_space<vmem>>, %arg4: memref<64x8xf32, #tpu.memory_space<vmem>>, %arg5: memref<1x8xf32, #tpu.memory_space<vmem>>, %arg6: memref<8x8xf32, #tpu.memory_space<vmem>>) attributes {dimension_semantics = [#tpu.dimension_semantics<parallel>], iteration_bounds = array<i64: 1>, scalar_prefetch = 0 : i64, scratch_operands = 0 : i64, tpu.core_type = #tpu.core_type<tc>, window_params = [{transform_indices = @transform_0, window_bounds = array<i64: 8, 128>}, {pipeline_mode = #tpu.pipeline_mode<synchronous>, transform_indices = @transform_1, window_bounds = array<i64: 128, 64>}, {pipeline_mode = #tpu.pipeline_mode<synchronous>, transform_indices = @transform_2, window_bounds = array<i64: 1, 64>}, {pipeline_mode = #tpu.pipeline_mode<synchronous>, transform_indices = @transform_3, window_bounds = array<i64: 64, 8>}, {pipeline_mode = #tpu.pipeline_mode<synchronous>, transform_indices = @transform_4, window_bounds = array<i64: 1, 8>}, {transform_indices = @transform_5, window_bounds = array<i64: 8, 8>}]} {
    %c0 = arith.constant 0 : index
    %c0_0 = arith.constant 0 : index
    %0 = vector.load %arg1[%c0, %c0_0] : memref<8x128xf32, #tpu.memory_space<vmem>>, vector<8x128xf32>
    %c0_1 = arith.constant 0 : index
    %c0_2 = arith.constant 0 : index
    %1 = vector.load %arg2[%c0_1, %c0_2] : memref<128x64xf32, #tpu.memory_space<vmem>>, vector<128x64xf32>
    %cst = arith.constant dense<0.000000e+00> : vector<8x64xf32>
    %2 = tpu.matmul %0, %1, %cst {dimension_numbers = #tpu.dot_dimension_numbers<[1], [0], [0], [1], [0, 0, 1, 1], [], []>} : vector<8x128xf32>, vector<128x64xf32>, vector<8x64xf32> -> vector<8x64xf32>
    %c0_3 = arith.constant 0 : index
    %c0_4 = arith.constant 0 : index
    %3 = vector.load %arg3[%c0_3, %c0_4] : memref<1x64xf32, #tpu.memory_space<vmem>>, vector<1x64xf32>
    %4 = vector.broadcast %3 : vector<1x64xf32> to vector<8x64xf32>
    %5 = arith.addf %2, %4 : vector<8x64xf32>
    %cst_5 = arith.constant 0.000000e+00 : f32
    %6 = vector.broadcast %cst_5 : f32 to vector<8x64xf32>
    %7 = arith.maximumf %5, %6 : vector<8x64xf32>
    %c0_6 = arith.constant 0 : index
    %c0_7 = arith.constant 0 : index
    %8 = vector.load %arg4[%c0_6, %c0_7] : memref<64x8xf32, #tpu.memory_space<vmem>>, vector<64x8xf32>
    %cst_8 = arith.constant dense<0.000000e+00> : vector<8x8xf32>
    %9 = tpu.matmul %7, %8, %cst_8 {dimension_numbers = #tpu.dot_dimension_numbers<[1], [0], [0], [1], [0, 0, 1, 1], [], []>} : vector<8x64xf32>, vector<64x8xf32>, vector<8x8xf32> -> vector<8x8xf32>
    %c0_9 = arith.constant 0 : index
    %c0_10 = arith.constant 0 : index
    %10 = vector.load %arg5[%c0_9, %c0_10] : memref<1x8xf32, #tpu.memory_space<vmem>>, vector<1x8xf32>
    %11 = vector.broadcast %10 : vector<1x8xf32> to vector<8x8xf32>
    %12 = arith.addf %9, %11 : vector<8x8xf32>
    %c0_11 = arith.constant 0 : index
    %c0_12 = arith.constant 0 : index
    %13 = vector.load %arg6[%c0_11, %c0_12] : memref<8x8xf32, #tpu.memory_space<vmem>>, vector<8x8xf32>
    tpu.vector_store %arg6[%c0_11, %c0_12], %12 {strides = array<i32>} : memref<8x8xf32, #tpu.memory_space<vmem>>, vector<8x8xf32>,
    return
  }
  func.func @transform_0(%arg0: i32) -> (i32, i32) {
    %c0_i32 = arith.constant 0 : i32
    %c0_i32_0 = arith.constant 0 : i32
    return %arg0, %c0_i32 : i32, i32
  }
  func.func @transform_1(%arg0: i32) -> (i32, i32) {
    %c0_i32 = arith.constant 0 : i32
    %c0_i32_0 = arith.constant 0 : i32
    %c0_i32_1 = arith.constant 0 : i32
    return %c0_i32, %c0_i32_0 : i32, i32
  }
  func.func @transform_2(%arg0: i32) -> (i32, i32) {
    %c0_i32 = arith.constant 0 : i32
    %c0_i32_0 = arith.constant 0 : i32
    %c0_i32_1 = arith.constant 0 : i32
    return %c0_i32, %c0_i32_0 : i32, i32
  }
  func.func @transform_3(%arg0: i32) -> (i32, i32) {
    %c0_i32 = arith.constant 0 : i32
    %c0_i32_0 = arith.constant 0 : i32
    %c0_i32_1 = arith.constant 0 : i32
    return %c0_i32, %c0_i32_0 : i32, i32
  }
  func.func @transform_4(%arg0: i32) -> (i32, i32) {
    %c0_i32 = arith.constant 0 : i32
    %c0_i32_0 = arith.constant 0 : i32
    %c0_i32_1 = arith.constant 0 : i32
    return %c0_i32, %c0_i32_0 : i32, i32
  }
  func.func @transform_5(%arg0: i32) -> (i32, i32) {
    %c0_i32 = arith.constant 0 : i32
    %c0_i32_0 = arith.constant 0 : i32
    return %arg0, %c0_i32 : i32, i32
  }
}

</mosaic_0001>

<llo_original>
// kernel: tpu_custom_call.1
$region0: #{tpu_custom_call.1}
  #allocation0 [shape = 'u32[]', space=smem, size = 0x4, offset = 0x4, fixed_abs, tag = 'smem constant byte address 0x4 - core index']
  #allocation1 [shape = 'u32[144,128]{1,0:T(1,128)}', space=vmem, size = 0x12000, scoped, tag = 'internal scratch']
  %s0 = inlined_call_operand.vmem [shape: f32[8,128], index: 0, kind: input, shape index: {}]
  %s1 = inlined_call_operand.vmem [shape: f32[128,64], index: 1, kind: input, shape index: {}]
  %s2 = inlined_call_operand.vmem [shape: f32[1,64], index: 2, kind: input, shape index: {}]
  %s3 = inlined_call_operand.vmem [shape: f32[64,8], index: 3, kind: input, shape index: {}]
  %s4 = inlined_call_operand.vmem [shape: f32[1,8], index: 4, kind: input, shape index: {}]
  %s5 = inlined_call_operand.hbm [shape: f32[8,8], index: 5, kind: output, shape index: {}]
  %s6 = sld [smem:[#allocation0]]
  $region30: #{tpu_custom_call.1} parent=0
    _
  %s8 = ssub.s32 1, %s6
  %s9 = scalar_select 0, %s8, %s6
  $region1: #{tpu_custom_call.1} parent=0
    #allocation2 [shape = 'u8[4096]{0}', space=vmem, size = 0x1000, scoped, tag = 'output window, operand 0, single buffered']
    #allocation3 [shape = 's32[1]{0}', space=sflag, size = 0x4, scoped, tag = 'scoped memory for tpu_custom_call.1']
    %10 = vsyncpa [#allocation3], 0
    // Predicated region
    $region2: #{tpu_custom_call.1} parent=1 // pred_check
      _
    $region3: #{tpu_custom_call.1} parent=1 // pred_check_branch
      %12 = sbr.rel (0) target = $region5
    $region4: #{tpu_custom_call.1} parent=1 // pred_region
      _
    $region5: #{tpu_custom_call.1} parent=1 // pred_fallthru
      _
    // Predicated region
    $region6: #{tpu_custom_call.1} parent=1 // pred_check
      _
    $region7: #{tpu_custom_call.1} parent=1 // pred_check_branch
      %14 = sbr.rel (0) target = $region9
    $region8: #{tpu_custom_call.1} parent=1 // pred_region
      _
    $region9: #{tpu_custom_call.1} parent=1 // pred_fallthru
      _
    // Predicated region
    $region10: #{tpu_custom_call.1} parent=1 // pred_check
      _
    $region11: #{tpu_custom_call.1} parent=1 // pred_check_branch
      %16 = sbr.rel (0) target = $region13
    $region12: #{tpu_custom_call.1} parent=1 // pred_region
      _
    $region13: #{tpu_custom_call.1} parent=1 // pred_fallthru
      _
    // Predicated region
    $region14: #{tpu_custom_call.1} parent=1 // pred_check
      _
    $region15: #{tpu_custom_call.1} parent=1 // pred_check_branch
      %18 = sbr.rel (0) target = $region17
    $region16: #{tpu_custom_call.1} parent=1 // pred_region
      _
    $region17: #{tpu_custom_call.1} parent=1 // pred_fallthru
      _
    // Predicated region
    $region18: #{tpu_custom_call.1} parent=1 // pred_check
      _
    $region19: #{tpu_custom_call.1} parent=1 // pred_check_branch
      %20 = sbr.rel (0) target = $region21
    $region20: #{tpu_custom_call.1} parent=1 // pred_region
      _
    $region21: #{tpu_custom_call.1} parent=1 // pred_fallthru
      _
    %v21 = vld [vmem:[%s0] sm:$0xff]
    %v22 = vld [vmem:[%s1] sm:$0xff]
    %v23 = vld [vmem:[%s1 + $0x8] sm:$0xff]
    %v24 = vld [vmem:[%s1 + $0x10] sm:$0xff]
    %v25 = vld [vmem:[%s1 + $0x18] sm:$0xff]
    %v26 = vld [vmem:[%s1 + $0x20] sm:$0xff]
    %v27 = vld [vmem:[%s1 + $0x28] sm:$0xff]
    %v28 = vld [vmem:[%s1 + $0x30] sm:$0xff]
    %v29 = vld [vmem:[%s1 + $0x38] sm:$0xff]
    %v30 = vld [vmem:[%s1 + $0x40] sm:$0xff]
    %v31 = vld [vmem:[%s1 + $0x48] sm:$0xff]
    %v32 = vld [vmem:[%s1 + $0x50] sm:$0xff]
    %v33 = vld [vmem:[%s1 + $0x58] sm:$0xff]
    %v34 = vld [vmem:[%s1 + $0x60] sm:$0xff]
    %v35 = vld [vmem:[%s1 + $0x68] sm:$0xff]
    %v36 = vld [vmem:[%s1 + $0x70] sm:$0xff]
    %v37 = vld [vmem:[%s1 + $0x78] sm:$0xff]
    %v38 = vld [vmem:[%s2] sm:$0x1]
    %v40 = vlaneseq
    %v41 = vshrl.u32 %v40, 7
    %v42 = vsub.s32 0, %v41
    %v43 = vrot.slane %v38, %v42
    %45 = vmatprep.subr.mxu0 0.0
    %46 = vmatpush1.msra.mxu0 %v22
    %47 = vmatprep.subr.mxu0 0.0
    %48 = vmatpush1.msra.mxu0 %v23
    %49 = vmatprep.subr.mxu0 0.0
    %50 = vmatpush1.msra.mxu0 %v24
    %51 = vmatprep.subr.mxu0 0.0
    %52 = vmatpush1.msra.mxu0 %v25
    %53 = vmatprep.subr.mxu0 0.0
    %54 = vmatpush1.msra.mxu0 %v26
    %55 = vmatprep.subr.mxu0 0.0
    %56 = vmatpush1.msra.mxu0 %v27
    %57 = vmatprep.subr.mxu0 0.0
    %58 = vmatpush1.msra.mxu0 %v28
    %59 = vmatprep.subr.mxu0 0.0
    %60 = vmatpush1.msra.mxu0 %v29
    %61 = vmatprep.subr.mxu0 0.0
    %62 = vmatpush1.msra.mxu0 %v30
    %63 = vmatprep.subr.mxu0 0.0
    %64 = vmatpush1.msra.mxu0 %v31
    %65 = vmatprep.subr.mxu0 0.0
    %66 = vmatpush1.msra.mxu0 %v32
    %67 = vmatprep.subr.mxu0 0.0
    %68 = vmatpush1.msra.mxu0 %v33
    %69 = vmatprep.subr.mxu0 0.0
    %70 = vmatpush1.msra.mxu0 %v34
    %71 = vmatprep.subr.mxu0 0.0
    %72 = vmatpush1.msra.mxu0 %v35
    %73 = vmatprep.subr.mxu0 0.0
    %74 = vmatpush1.msra.mxu0 %v36
    %75 = vmatprep.subr.mxu0 0.0
    %76 = vmatpush1.msra.mxu0 %v37
    %77 = vmatprep.subr.mxu0 0.0
    %78 = vmatpush1.msra.mxu0 0.0
    %79 = vmatprep.subr.mxu0 0.0
    %80 = vmatpush1.msra.mxu0 0.0
    %81 = vmatprep.subr.mxu0 0.0
    %82 = vmatpush1.msra.mxu0 0.0
    %83 = vmatprep.subr.mxu0 0.0
    %84 = vmatpush1.msra.mxu0 0.0
    %85 = vmatprep.subr.mxu0 0.0
    %86 = vmatpush1.msra.mxu0 0.0
    %87 = vmatprep.subr.mxu0 0.0
    %88 = vmatpush1.msra.mxu0 0.0
    %89 = vmatprep.subr.mxu0 0.0
    %90 = vmatpush1.msra.mxu0 0.0
    %91 = vmatprep.subr.mxu0 0.0
    %92 = vmatpush1.msra.mxu0 0.0
    %93 = vmatprep.subr.mxu0 0.0
    %94 = vmatpush1.msra.mxu0 0.0
    %95 = vmatprep.subr.mxu0 0.0
    %96 = vmatpush1.msra.mxu0 0.0
    %97 = vmatprep.subr.mxu0 0.0
    %98 = vmatpush1.msra.mxu0 0.0
    %99 = vmatprep.subr.mxu0 0.0
    %100 = vmatpush1.msra.mxu0 0.0
    %101 = vmatprep.subr.mxu0 0.0
    %102 = vmatpush1.msra.mxu0 0.0
    %103 = vmatprep.subr.mxu0 0.0
    %104 = vmatpush1.msra.mxu0 0.0
    %105 = vmatprep.subr.mxu0 0.0
    %106 = vmatpush1.msra.mxu0 0.0
    %107 = vmatprep.subr.mxu0 0.0
    %108 = vmatpush1.msra.mxu0 0.0
    %109 = vmatprep.mubr.f32.mxu0 0.0
    %110 = vmatmul.mubr.f32.gmra.mrb[0].mxu0 %v21
    %v111 = vpop.f32.mrb[0].mxu0
    %v112 = vadd.f32 %v43, %v111
    %v113 = vpop.f32.mrb[0].mxu0
    %114 = vdwg.mxu0
    %v115 = vmax.f32 %v112, 0.0
    %v116 = vld [vmem:[%s3] sm:$0xff]
    %v117 = vld [vmem:[%s3 + $0x8] sm:$0xff]
    %v118 = vld [vmem:[%s3 + $0x10] sm:$0xff]
    %v119 = vld [vmem:[%s3 + $0x18] sm:$0xff]
    %v120 = vld [vmem:[%s3 + $0x20] sm:$0xff]
    %v121 = vld [vmem:[%s3 + $0x28] sm:$0xff]
    %v122 = vld [vmem:[%s3 + $0x30] sm:$0xff]
    %v123 = vld [vmem:[%s3 + $0x38] sm:$0xff]
    %v124 = vld [vmem:[%s4] sm:$0x1]
    %v126 = vlaneseq
    %v127 = vshrl.u32 %v126, 7
    %v128 = vsub.s32 0, %v127
    %v129 = vrot.slane %v124, %v128
    %vm131 = vcmask 523264
    %v133 = vsel %vm131, %v115, 0
    %135 = vmatprep.subr.mxu0 0.0
    %136 = vmatpush1.msra.mxu0 %v116
    %137 = vmatprep.subr.mxu0 0.0
    %138 = vmatpush1.msra.mxu0 %v117
    %139 = vmatprep.subr.mxu0 0.0
    %140 = vmatpush1.msra.mxu0 %v118
    %141 = vmatprep.subr.mxu0 0.0
    %142 = vmatpush1.msra.mxu0 %v119
    %143 = vmatprep.subr.mxu0 0.0
    %144 = vmatpush1.msra.mxu0 %v120
    %145 = vmatprep.subr.mxu0 0.0
    %146 = vmatpush1.msra.mxu0 %v121
    %147 = vmatprep.subr.mxu0 0.0
    %148 = vmatpush1.msra.mxu0 %v122
    %149 = vmatprep.subr.mxu0 0.0
    %150 = vmatpush1.msra.mxu0 %v123
    %151 = vmatprep.subr.mxu0 0.0
    %152 = vmatpush1.msra.mxu0 0.0
    %153 = vmatprep.subr.mxu0 0.0
    %154 = vmatpush1.msra.mxu0 0.0
    %155 = vmatprep.subr.mxu0 0.0
    %156 = vmatpush1.msra.mxu0 0.0
    %157 = vmatprep.subr.mxu0 0.0
    %158 = vmatpush1.msra.mxu0 0.0
    %159 = vmatprep.subr.mxu0 0.0
    %160 = vmatpush1.msra.mxu0 0.0
    %161 = vmatprep.subr.mxu0 0.0
    %162 = vmatpush1.msra.mxu0 0.0
    %163 = vmatprep.subr.mxu0 0.0
    %164 = vmatpush1.msra.mxu0 0.0
    %165 = vmatprep.subr.mxu0 0.0
    %166 = vmatpush1.msra.mxu0 0.0
    %167 = vmatprep.subr.mxu0 0.0
    %168 = vmatpush1.msra.mxu0 0.0
    %169 = vmatprep.subr.mxu0 0.0
    %170 = vmatpush1.msra.mxu0 0.0
    %171 = vmatprep.subr.mxu0 0.0
    %172 = vmatpush1.msra.mxu0 0.0
    %173 = vmatprep.subr.mxu0 0.0
    %174 = vmatpush1.msra.mxu0 0.0
    %175 = vmatprep.subr.mxu0 0.0
    %176 = vmatpush1.msra.mxu0 0.0
    %177 = vmatprep.subr.mxu0 0.0
    %178 = vmatpush1.msra.mxu0 0.0
    %179 = vmatprep.subr.mxu0 0.0
    %180 = vmatpush1.msra.mxu0 0.0
    %181 = vmatprep.subr.mxu0 0.0
    %182 = vmatpush1.msra.mxu0 0.0
    %183 = vmatprep.subr.mxu0 0.0
    %184 = vmatpush1.msra.mxu0 0.0
    %185 = vmatprep.subr.mxu0 0.0
    %186 = vmatpush1.msra.mxu0 0.0
    %187 = vmatprep.subr.mxu0 0.0
    %188 = vmatpush1.msra.mxu0 0.0
    %189 = vmatprep.subr.mxu0 0.0
    %190 = vmatpush1.msra.mxu0 0.0
    %191 = vmatprep.subr.mxu0 0.0
    %192 = vmatpush1.msra.mxu0 0.0
    %193 = vmatprep.subr.mxu0 0.0
    %194 = vmatpush1.msra.mxu0 0.0
    %195 = vmatprep.subr.mxu0 0.0
    %196 = vmatpush1.msra.mxu0 0.0
    %197 = vmatprep.subr.mxu0 0.0
    %198 = vmatpush1.msra.mxu0 0.0
    %199 = vmatprep.mubr.f32.mxu0 0.0
    %200 = vmatmul.mubr.f32.gmra.mrb[0].mxu0 %v133
    %v201 = vpop.f32.mrb[0].mxu0
    %v202 = vadd.f32 %v129, %v201
    %v203 = vpop.f32.mrb[0].mxu0
    %204 = vdwg.mxu0
    %vm205 = vcmask 64512
    %206 = vst.msk [vmem:[#allocation2] sm:$0xff] %vm205, %v202
    // Predicated region
    $region22: #{tpu_custom_call.1} parent=1 // pred_check
      _
    $region23: #{tpu_custom_call.1} parent=1 // pred_check_branch
      %208 = sbr.rel (0) target = $region25
    $region24: #{tpu_custom_call.1} parent=1 // pred_region
      %s210 = ssub.s32 128, 128
      %211 = vsyncadd [#allocation3], %s210
      %s213 = sshll.u32 [#allocation2], 4
      %s214 = int_to_ptr.vmem [resolvable:$true] %s213
      %216 = dma.vmem_to_hbm [thread:$0]  %s214, 128, %s5, [#allocation3]
    $region25: #{tpu_custom_call.1} parent=1 // pred_fallthru
      _
    // Predicated region
    $region26: #{tpu_custom_call.1} parent=1 // pred_check
      _
    $region27: #{tpu_custom_call.1} parent=1 // pred_check_branch
      %218 = sbr.rel (0) target = $region29
    $region28: #{tpu_custom_call.1} parent=1 // pred_region
      %219 = dma.done [#allocation3], 128
    $region29: #{tpu_custom_call.1} parent=1 // pred_fallthru
      _
    %220 = vsyncpa [#allocation3], 1

// kernel: tpu_custom_call.1
$region0: #{tpu_custom_call.1}
  #allocation0 [shape = 'u32[]', space=smem, size = 0x4, offset = 0x4, fixed_abs, tag = 'smem constant byte address 0x4 - core index']
  #allocation1 [shape = 'u32[144,128]{1,0:T(1,128)}', space=vmem, size = 0x12000, scoped, tag = 'internal scratch']
  %s0 = inlined_call_operand.vmem [shape: f32[8,128], index: 0, kind: input, shape index: {}]
  %s1 = inlined_call_operand.vmem [shape: f32[128,64], index: 1, kind: input, shape index: {}]
  %s2 = inlined_call_operand.vmem [shape: f32[1,64], index: 2, kind: input, shape index: {}]
  %s3 = inlined_call_operand.vmem [shape: f32[64,8], index: 3, kind: input, shape index: {}]
  %s4 = inlined_call_operand.vmem [shape: f32[1,8], index: 4, kind: input, shape index: {}]
  %s5 = inlined_call_operand.hbm [shape: f32[8,8], index: 5, kind: output, shape index: {}]
  %s6 = sld [smem:[#allocation0]]
  $region30: #{tpu_custom_call.1} parent=0
    _
  %s8 = ssub.s32 1, %s6
  %s9 = scalar_select 0, %s8, %s6
  $region1: #{tpu_custom_call.1} parent=0
    #allocation2 [shape = 'u8[4096]{0}', space=vmem, size = 0x1000, scoped, tag = 'output window, operand 0, single buffered']
    #allocation3 [shape = 's32[1]{0}', space=sflag, size = 0x4, scoped, tag = 'scoped memory for tpu_custom_call.1']
    %10 = vsyncpa [#allocation3], 0
    // Predicated region
    $region2: #{tpu_custom_call.1} parent=1 // pred_check
      _
    $region3: #{tpu_custom_call.1} parent=1 // pred_check_branch
      %12 = sbr.rel (0) target = $region5
    $region4: #{tpu_custom_call.1} parent=1 // pred_region
      _
    $region5: #{tpu_custom_call.1} parent=1 // pred_fallthru
      _
    // Predicated region
    $region6: #{tpu_custom_call.1} parent=1 // pred_check
      _
    $region7: #{tpu_custom_call.1} parent=1 // pred_check_branch
      %14 = sbr.rel (0) target = $region9
    $region8: #{tpu_custom_call.1} parent=1 // pred_region
      _
    $region9: #{tpu_custom_call.1} parent=1 // pred_fallthru
      _
    // Predicated region
    $region10: #{tpu_custom_call.1} parent=1 // pred_check
      _
    $region11: #{tpu_custom_call.1} parent=1 // pred_check_branch
      %16 = sbr.rel (0) target = $region13
    $region12: #{tpu_custom_call.1} parent=1 // pred_region
      _
    $region13: #{tpu_custom_call.1} parent=1 // pred_fallthru
      _
    // Predicated region
    $region14: #{tpu_custom_call.1} parent=1 // pred_check
      _
    $region15: #{tpu_custom_call.1} parent=1 // pred_check_branch
      %18 = sbr.rel (0) target = $region17
    $region16: #{tpu_custom_call.1} parent=1 // pred_region
      _
    $region17: #{tpu_custom_call.1} parent=1 // pred_fallthru
      _
    // Predicated region
    $region18: #{tpu_custom_call.1} parent=1 // pred_check
      _
    $region19: #{tpu_custom_call.1} parent=1 // pred_check_branch
      %20 = sbr.rel (0) target = $region21
    $region20: #{tpu_custom_call.1} parent=1 // pred_region
      _
    $region21: #{tpu_custom_call.1} parent=1 // pred_fallthru
      _
    %v21 = vld [vmem:[%s0] sm:$0xff]
    %v22 = vld [vmem:[%s1] sm:$0xff]
    %v23 = vld [vmem:[%s1 + $0x8] sm:$0xff]
    %v24 = vld [vmem:[%s1 + $0x10] sm:$0xff]
    %v25 = vld [vmem:[%s1 + $0x18] sm:$0xff]
    %v26 = vld [vmem:[%s1 + $0x20] sm:$0xff]
    %v27 = vld [vmem:[%s1 + $0x28] sm:$0xff]
    %v28 = vld [vmem:[%s1 + $0x30] sm:$0xff]
    %v29 = vld [vmem:[%s1 + $0x38] sm:$0xff]
    %v30 = vld [vmem:[%s1 + $0x40] sm:$0xff]
    %v31 = vld [vmem:[%s1 + $0x48] sm:$0xff]
    %v32 = vld [vmem:[%s1 + $0x50] sm:$0xff]
    %v33 = vld [vmem:[%s1 + $0x58] sm:$0xff]
    %v34 = vld [vmem:[%s1 + $0x60] sm:$0xff]
    %v35 = vld [vmem:[%s1 + $0x68] sm:$0xff]
    %v36 = vld [vmem:[%s1 + $0x70] sm:$0xff]
    %v37 = vld [vmem:[%s1 + $0x78] sm:$0xff]
    %v38 = vld [vmem:[%s2] sm:$0x1]
    %v40 = vlaneseq
    %v41 = vshrl.u32 %v40, 7
    %v42 = vsub.s32 0, %v41
    %v43 = vrot.slane %v38, %v42
    %45 = vmatprep.subr.mxu0 0.0
    %46 = vmatpush1.msra.mxu0 %v22
    %47 = vmatprep.subr.mxu0 0.0
    %48 = vmatpush1.msra.mxu0 %v23
    %49 = vmatprep.subr.mxu0 0.0
    %50 = vmatpush1.msra.mxu0 %v24
    %51 = vmatprep.subr.mxu0 0.0
    %52 = vmatpush1.msra.mxu0 %v25
    %53 = vmatprep.subr.mxu0 0.0
    %54 = vmatpush1.msra.mxu0 %v26
    %55 = vmatprep.subr.mxu0 0.0
    %56 = vmatpush1.msra.mxu0 %v27
    %57 = vmatprep.subr.mxu0 0.0
    %58 = vmatpush1.msra.mxu0 %v28
    %59 = vmatprep.subr.mxu0 0.0
    %60 = vmatpush1.msra.mxu0 %v29
    %61 = vmatprep.subr.mxu0 0.0
    %62 = vmatpush1.msra.mxu0 %v30
    %63 = vmatprep.subr.mxu0 0.0
    %64 = vmatpush1.msra.mxu0 %v31
    %65 = vmatprep.subr.mxu0 0.0
    %66 = vmatpush1.msra.mxu0 %v32
    %67 = vmatprep.subr.mxu0 0.0
    %68 = vmatpush1.msra.mxu0 %v33
    %69 = vmatprep.subr.mxu0 0.0
    %70 = vmatpush1.msra.mxu0 %v34
    %71 = vmatprep.subr.mxu0 0.0
    %72 = vmatpush1.msra.mxu0 %v35
    %73 = vmatprep.subr.mxu0 0.0
    %74 = vmatpush1.msra.mxu0 %v36
    %75 = vmatprep.subr.mxu0 0.0
    %76 = vmatpush1.msra.mxu0 %v37
    %77 = vmatprep.subr.mxu0 0.0
    %78 = vmatpush1.msra.mxu0 0.0
    %79 = vmatprep.subr.mxu0 0.0
    %80 = vmatpush1.msra.mxu0 0.0
    %81 = vmatprep.subr.mxu0 0.0
    %82 = vmatpush1.msra.mxu0 0.0
    %83 = vmatprep.subr.mxu0 0.0
    %84 = vmatpush1.msra.mxu0 0.0
    %85 = vmatprep.subr.mxu0 0.0
    %86 = vmatpush1.msra.mxu0 0.0
    %87 = vmatprep.subr.mxu0 0.0
    %88 = vmatpush1.msra.mxu0 0.0
    %89 = vmatprep.subr.mxu0 0.0
    %90 = vmatpush1.msra.mxu0 0.0
    %91 = vmatprep.subr.mxu0 0.0
    %92 = vmatpush1.msra.mxu0 0.0
    %93 = vmatprep.subr.mxu0 0.0
    %94 = vmatpush1.msra.mxu0 0.0
    %95 = vmatprep.subr.mxu0 0.0
    %96 = vmatpush1.msra.mxu0 0.0
    %97 = vmatprep.subr.mxu0 0.0
    %98 = vmatpush1.msra.mxu0 0.0
    %99 = vmatprep.subr.mxu0 0.0
    %100 = vmatpush1.msra.mxu0 0.0
    %101 = vmatprep.subr.mxu0 0.0
    %102 = vmatpush1.msra.mxu0 0.0
    %103 = vmatprep.subr.mxu0 0.0
    %104 = vmatpush1.msra.mxu0 0.0
    %105 = vmatprep.subr.mxu0 0.0
    %106 = vmatpush1.msra.mxu0 0.0
    %107 = vmatprep.subr.mxu0 0.0
    %108 = vmatpush1.msra.mxu0 0.0
    %109 = vmatprep.mubr.f32.mxu0 0.0
    %110 = vmatmul.mubr.f32.gmra.mrb[0].mxu0 %v21
    %v111 = vpop.f32.mrb[0].mxu0
    %v112 = vadd.f32 %v43, %v111
    %v113 = vpop.f32.mrb[0].mxu0
    %114 = vdwg.mxu0
    %v115 = vmax.f32 %v112, 0.0
    %v116 = vld [vmem:[%s3] sm:$0xff]
    %v117 = vld [vmem:[%s3 + $0x8] sm:$0xff]
    %v118 = vld [vmem:[%s3 + $0x10] sm:$0xff]
    %v119 = vld [vmem:[%s3 + $0x18] sm:$0xff]
    %v120 = vld [vmem:[%s3 + $0x20] sm:$0xff]
    %v121 = vld [vmem:[%s3 + $0x28] sm:$0xff]
    %v122 = vld [vmem:[%s3 + $0x30] sm:$0xff]
    %v123 = vld [vmem:[%s3 + $0x38] sm:$0xff]
    %v124 = vld [vmem:[%s4] sm:$0x1]
    %v126 = vlaneseq
    %v127 = vshrl.u32 %v126, 7
    %v128 = vsub.s32 0, %v127
    %v129 = vrot.slane %v124, %v128
    %vm131 = vcmask 523264
    %v133 = vsel %vm131, %v115, 0
    %135 = vmatprep.subr.mxu0 0.0
    %136 = vmatpush1.msra.mxu0 %v116
    %137 = vmatprep.subr.mxu0 0.0
    %138 = vmatpush1.msra.mxu0 %v117
    %139 = vmatprep.subr.mxu0 0.0
    %140 = vmatpush1.msra.mxu0 %v118
    %141 = vmatprep.subr.mxu0 0.0
    %142 = vmatpush1.msra.mxu0 %v119
    %143 = vmatprep.subr.mxu0 0.0
    %144 = vmatpush1.msra.mxu0 %v120
    %145 = vmatprep.subr.mxu0 0.0
    %146 = vmatpush1.msra.mxu0 %v121
    %147 = vmatprep.subr.mxu0 0.0
    %148 = vmatpush1.msra.mxu0 %v122
    %149 = vmatprep.subr.mxu0 0.0
    %150 = vmatpush1.msra.mxu0 %v123
    %151 = vmatprep.subr.mxu0 0.0
    %152 = vmatpush1.msra.mxu0 0.0
    %153 = vmatprep.subr.mxu0 0.0
    %154 = vmatpush1.msra.mxu0 0.0
    %155 = vmatprep.subr.mxu0 0.0
    %156 = vmatpush1.msra.mxu0 0.0
    %157 = vmatprep.subr.mxu0 0.0
    %158 = vmatpush1.msra.mxu0 0.0
    %159 = vmatprep.subr.mxu0 0.0
    %160 = vmatpush1.msra.mxu0 0.0
    %161 = vmatprep.subr.mxu0 0.0
    %162 = vmatpush1.msra.mxu0 0.0
    %163 = vmatprep.subr.mxu0 0.0
    %164 = vmatpush1.msra.mxu0 0.0
    %165 = vmatprep.subr.mxu0 0.0
    %166 = vmatpush1.msra.mxu0 0.0
    %167 = vmatprep.subr.mxu0 0.0
    %168 = vmatpush1.msra.mxu0 0.0
    %169 = vmatprep.subr.mxu0 0.0
    %170 = vmatpush1.msra.mxu0 0.0
    %171 = vmatprep.subr.mxu0 0.0
    %172 = vmatpush1.msra.mxu0 0.0
    %173 = vmatprep.subr.mxu0 0.0
    %174 = vmatpush1.msra.mxu0 0.0
    %175 = vmatprep.subr.mxu0 0.0
    %176 = vmatpush1.msra.mxu0 0.0
    %177 = vmatprep.subr.mxu0 0.0
    %178 = vmatpush1.msra.mxu0 0.0
    %179 = vmatprep.subr.mxu0 0.0
    %180 = vmatpush1.msra.mxu0 0.0
    %181 = vmatprep.subr.mxu0 0.0
    %182 = vmatpush1.msra.mxu0 0.0
    %183 = vmatprep.subr.mxu0 0.0
    %184 = vmatpush1.msra.mxu0 0.0
    %185 = vmatprep.subr.mxu0 0.0
    %186 = vmatpush1.msra.mxu0 0.0
    %187 = vmatprep.subr.mxu0 0.0
    %188 = vmatpush1.msra.mxu0 0.0
    %189 = vmatprep.subr.mxu0 0.0
    %190 = vmatpush1.msra.mxu0 0.0
    %191 = vmatprep.subr.mxu0 0.0
    %192 = vmatpush1.msra.mxu0 0.0
    %193 = vmatprep.subr.mxu0 0.0
    %194 = vmatpush1.msra.mxu0 0.0
    %195 = vmatprep.subr.mxu0 0.0
    %196 = vmatpush1.msra.mxu0 0.0
    %197 = vmatprep.subr.mxu0 0.0
    %198 = vmatpush1.msra.mxu0 0.0
    %199 = vmatprep.mubr.f32.mxu0 0.0
    %200 = vmatmul.mubr.f32.gmra.mrb[0].mxu0 %v133
    %v201 = vpop.f32.mrb[0].mxu0
    %v202 = vadd.f32 %v129, %v201
    %v203 = vpop.f32.mrb[0].mxu0
    %204 = vdwg.mxu0
    %vm205 = vcmask 64512
    %206 = vst.msk [vmem:[#allocation2] sm:$0xff] %vm205, %v202
    // Predicated region
    $region22: #{tpu_custom_call.1} parent=1 // pred_check
      _
    $region23: #{tpu_custom_call.1} parent=1 // pred_check_branch
      %208 = sbr.rel (0) target = $region25
    $region24: #{tpu_custom_call.1} parent=1 // pred_region
      %s210 = ssub.s32 128, 128
      %211 = vsyncadd [#allocation3], %s210
      %s213 = sshll.u32 [#allocation2], 4
      %s214 = int_to_ptr.vmem [resolvable:$true] %s213
      %216 = dma.vmem_to_hbm [thread:$0]  %s214, 128, %s5, [#allocation3]
    $region25: #{tpu_custom_call.1} parent=1 // pred_fallthru
      _
    // Predicated region
    $region26: #{tpu_custom_call.1} parent=1 // pred_check
      _
    $region27: #{tpu_custom_call.1} parent=1 // pred_check_branch
      %218 = sbr.rel (0) target = $region29
    $region28: #{tpu_custom_call.1} parent=1 // pred_region
      %219 = dma.done [#allocation3], 128
    $region29: #{tpu_custom_call.1} parent=1 // pred_fallthru
      _
    %220 = vsyncpa [#allocation3], 1

</llo_original>
